<compile_context>
chip_gen: v5e
topology: v5e:2x2
jax: 0.10.0
libtpu: 0.0.40
codegen_flags: <defaults>
</compile_context>

<pallas_src>
import functools

import jax
import jax.numpy as jnp
from jax import lax
from jax.experimental import pallas as pl
from jax.experimental.pallas import tpu as pltpu

_LANES = 128
_CHUNK_ELEMS = 8192                      # ~8 f32 vregs per live temporary
_VMEM_INPUT_BUDGET = 12 * 1024 * 1024    # 2 inputs x 2 buffers of (C, row_tile, W)
_MAX_ROW_TILE = 2048


def _round_up(x: int, m: int) -> int:
    return ((x + m - 1) // m) * m


def _psnr_kernel(raw_ref, dst_ref, out_ref, acc_ref, *,
                 convert_y: bool, channels: int, data_range: float, eps: float,
                 n_valid: float, img_h: int, img_w: int, crop: int,
                 row_tile: int, chunk: int, num_chunks: int,
                 mask_rows: bool, mask_cols: bool):
    # raw_ref / dst_ref: (1, C, row_tile, W) VMEM tiles of the native layout.
    k = pl.program_id(1)

    @pl.when(k == 0)
    def _init():
        acc_ref[...] = jnp.zeros_like(acc_ref)

    row_base = k * row_tile

    col_ok = None
    if mask_cols:
        col_idx = lax.broadcasted_iota(jnp.int32, (chunk, img_w), 1)
        col_ok = (col_idx >= crop) & (col_idx < img_w - crop)

    def chunk_body(j, carry):
        r0 = j * chunk
        if chunk % 8 == 0:
            r0 = pl.multiple_of(r0, 8)

        if convert_y:
            # Y = (65.481 R + 128.553 G + 24.966 B + 16) / 255; the +16 offsets
            # cancel in (Y_raw - Y_dst) and data_range is folded into finalize.
            diff = None
            for ci, wc in enumerate((65.481, 128.553, 24.966)):
                xc = raw_ref[0, ci, pl.ds(r0, chunk), :].astype(jnp.float32)
                yc = dst_ref[0, ci, pl.ds(r0, chunk), :].astype(jnp.float32)
                t = (wc / 255.0) * (xc - yc)
                diff = t if diff is None else diff + t
            sq = diff * diff                                   # (chunk, W)
        else:
            sq = None
            for ci in range(channels):
                xc = raw_ref[0, ci, pl.ds(r0, chunk), :].astype(jnp.float32)
                yc = dst_ref[0, ci, pl.ds(r0, chunk), :].astype(jnp.float32)
                d = xc - yc
                sq = d * d if sq is None else sq + d * d       # (chunk, W)

        if mask_rows or mask_cols:
            # Select (never multiply-by-0/1): the crop border, and any stale /
            # garbage rows of a partial last tile, must not contribute.
            valid = None
            if mask_rows:
                row_idx = (row_base + r0
                           + lax.broadcasted_iota(jnp.int32, (chunk, img_w), 0))
                valid = row_idx < (img_h - crop)
                if crop > 0:
                    valid &= row_idx >= crop
            if mask_cols:
                valid = col_ok if valid is None else (valid & col_ok)
            sq = jnp.where(valid, sq, 0.0)

        # Sublane fold into the (1, W) accumulator: cheap VALU adds + one small
        # sublane reduce per chunk; keeps the lane reduce / log10 off this path.
        acc_ref[...] += jnp.sum(sq, axis=0, keepdims=True)
        return carry

    lax.fori_loop(0, num_chunks, chunk_body, 0, unroll=True)

    @pl.when(k == pl.num_programs(1) - 1)
    def _finalize():
        total = jnp.sum(acc_ref[...])
        dr2 = jnp.float32(data_range) * jnp.float32(data_range)
        # mean((x*dr - y*dr)^2 + eps) == dr^2 * SSE / count + eps
        mse = dr2 * total / jnp.float32(n_valid) + jnp.float32(eps)
        psnr = 10.0 * jnp.log10(dr2 / mse)
        out_ref[...] = jnp.broadcast_to(psnr, out_ref.shape).astype(out_ref.dtype)


class PSNR:
    """Pallas-TPU PSNR metric mirroring the PyTorch module's forward semantics."""

    def __init__(self, crop_border: int = 0, only_test_y_channel: bool = True,
                 data_range: float = 1.0, eps: float = 1e-8):
        self.crop_border = int(crop_border)
        self.only_test_y_channel = bool(only_test_y_channel)
        self.data_range = float(data_range)
        self.eps = float(eps)

    def __call__(self, raw_tensor: jax.Array, dst_tensor: jax.Array) -> jax.Array:
        assert raw_tensor.shape == dst_tensor.shape, (
            f"Supplied images have different sizes {raw_tensor.shape} and {dst_tensor.shape}")

        n, c, h, w = raw_tensor.shape
        crop = self.crop_border
        assert h > 2 * crop and w > 2 * crop, "crop_border too large for image"
        convert_y = self.only_test_y_channel and c == 3

        itemsize = jnp.dtype(raw_tensor.dtype).itemsize
        w_pad = _round_up(w, _LANES)          # lane padding inside VMEM

        # Rows per in-kernel sub-chunk: ~8K elements keeps live f32 temporaries
        # to a handful of vregs (no spills) as row_tile grows.
        chunk = max(8, (_CHUNK_ELEMS // w_pad) // 8 * 8)

        if h <= chunk:
            # Single block covering all rows (block dim == full H is always legal).
            row_tile = h
            chunk = h
        else:
            # row_tile from the double-buffered VMEM input budget (2 inputs x 2
            # buffers), multiple of `chunk` (hence of 8), capped at 2048 rows.
            per_row = 2 * 2 * c * w_pad * itemsize
            row_budget = max(chunk, _VMEM_INPUT_BUDGET // per_row)
            row_tile = min(row_budget, _MAX_ROW_TILE, h)
            row_tile = max(chunk, (row_tile // chunk) * chunk)
        num_chunks = row_tile // chunk
        grid_k = pl.cdiv(h, row_tile)

        mask_rows = (crop > 0) or (h % row_tile != 0)
        mask_cols = crop > 0
        n_valid = (1 if convert_y else c) * (h - 2 * crop) * (w - 2 * crop)

        kernel = functools.partial(
            _psnr_kernel,
            convert_y=convert_y, channels=c,
            data_range=self.data_range, eps=self.eps, n_valid=float(n_valid),
            img_h=h, img_w=w, crop=crop,
            row_tile=row_tile, chunk=chunk, num_chunks=num_chunks,
            mask_rows=mask_rows, mask_cols=mask_cols)

        dbuf_bytes = 2 * 2 * c * row_tile * w_pad * itemsize
        vmem_limit = int(min(64 << 20, max(32 << 20, 2 * dbuf_bytes)))

        cost = pl.CostEstimate(
            flops=int(6 * n * c * h * w),
            transcendentals=int(n),
            bytes_accessed=int(2 * n * c * h * w * itemsize + n * 8 * _LANES * 4))

        out = pl.pallas_call(
            kernel,
            out_shape=jax.ShapeDtypeStruct((n, 8, _LANES), jnp.float32),
            grid_spec=pltpu.PrefetchScalarGridSpec(
                num_scalar_prefetch=0,
                grid=(n, grid_k),
                in_specs=[
                    pl.BlockSpec((1, c, row_tile, w), lambda i, k: (i, 0, k, 0)),
                    pl.BlockSpec((1, c, row_tile, w), lambda i, k: (i, 0, k, 0)),
                ],
                out_specs=pl.BlockSpec((1, 8, _LANES), lambda i, k: (i, 0, 0)),
                scratch_shapes=[pltpu.VMEM((1, w), jnp.float32)],
            ),
            compiler_params=pltpu.CompilerParams(
                dimension_semantics=("parallel", "arbitrary"),
                vmem_limit_bytes=vmem_limit),
            cost_estimate=cost,
        )(raw_tensor, dst_tensor)

        # Note: for single-image batches on v7x (2 TensorCores) the row-tile
        # range could additionally be split across a second "parallel" axis with
        # the log10 epilogue moved to the wrapper; not done here to keep the
        # accumulator pattern simple and identical on all generations.
        return out[:, 0, 0]


def _psnr_reference(raw, dst, crop_border, only_test_y_channel,
                    data_range=1.0, eps=1e-8):
    """Pure-JAX reference mirroring the PyTorch code."""
    if crop_border > 0:
        raw = raw[..., crop_border:-crop_border, crop_border:-crop_border]
        dst = dst[..., crop_border:-crop_border, crop_border:-crop_border]
    if only_test_y_channel and raw.shape[1] == 3:
        wv = jnp.array([65.481, 128.553, 24.966], dtype=jnp.float32).reshape(1, 3, 1, 1)
        raw = (jnp.sum(raw * wv, axis=1, keepdims=True) + 16.0) / 255.0
        dst = (jnp.sum(dst * wv, axis=1, keepdims=True) + 16.0) / 255.0
    mse = jnp.mean((raw * data_range - dst * data_range) ** 2 + eps, axis=(1, 2, 3))
    return 10.0 * jnp.log10(data_range ** 2 / mse)


if __name__ == "__main__":
    key = jax.random.PRNGKey(0)
    k1, k2, k3, k4, k5, k6, k7, k8 = jax.random.split(key, 8)

    # 1) RGB images, Y-channel PSNR with border crop (crop folded into kernel).
    raw = jax.random.uniform(k1, (2, 3, 16, 16), dtype=jnp.float32)
    dst = jax.random.uniform(k2, (2, 3, 16, 16), dtype=jnp.float32)
    out = jax.block_until_ready(PSNR(crop_border=2, only_test_y_channel=True)(raw, dst))
    ref = _psnr_reference(raw, dst, 2, True)
    assert out.shape == (2,)
    assert jnp.allclose(out, ref, rtol=1e-4, atol=1e-3), (out, ref)

    # 2) Non-Y path (C != 3 -> plain per-pixel MSE over all channels), no crop.
    raw4 = jax.random.uniform(k3, (2, 4, 16, 16), dtype=jnp.float32)
    dst4 = jax.random.uniform(k4, (2, 4, 16, 16), dtype=jnp.float32)
    out4 = jax.block_until_ready(PSNR(crop_border=0, only_test_y_channel=True)(raw4, dst4))
    ref4 = _psnr_reference(raw4, dst4, 0, True)
    assert jnp.allclose(out4, ref4, rtol=1e-4, atol=1e-3), (out4, ref4)

    # 3) Multi row-tile with a partial last tile (H=72 vs 64-row tile), no crop.
    raw5 = jax.random.uniform(k5, (1, 3, 72, 16), dtype=jnp.float32)
    dst5 = jax.random.uniform(k6, (1, 3, 72, 16), dtype=jnp.float32)
    out5 = jax.block_until_ready(PSNR(crop_border=0, only_test_y_channel=True)(raw5, dst5))
    ref5 = _psnr_reference(raw5, dst5, 0, True)
    assert jnp.allclose(out5, ref5, rtol=1e-4, atol=1e-3), (out5, ref5)

    # 4) Odd H/W (not multiples of 8/128) with crop -> exercises iota masks.
    raw6 = jax.random.uniform(k7, (1, 3, 20, 24), dtype=jnp.float32)
    dst6 = jax.random.uniform(k8, (1, 3, 20, 24), dtype=jnp.float32)
    out6 = jax.block_until_ready(PSNR(crop_border=1, only_test_y_channel=True)(raw6, dst6))
    ref6 = _psnr_reference(raw6, dst6, 1, True)
    assert jnp.allclose(out6, ref6, rtol=1e-4, atol=1e-3), (out6, ref6)

    print("KERNEL_OK")
</pallas_src>

<mosaic_0001>
module attributes {stable_mosaic.version = 11 : i64} {
  func.func @_psnr_kernel(%arg0: i32, %arg1: i32, %arg2: memref<1x3x16x16xf32, #tpu.memory_space<vmem>>, %arg3: memref<1x3x16x16xf32, #tpu.memory_space<vmem>>, %arg4: memref<1x8x128xf32, #tpu.memory_space<vmem>>, %arg5: memref<1x16xf32, #tpu.memory_space<vmem>>) attributes {dimension_semantics = [#tpu.dimension_semantics<parallel>, #tpu.dimension_semantics<arbitrary>], iteration_bounds = array<i64: 2, 1>, scalar_prefetch = 0 : i64, scratch_operands = 1 : i64, tpu.core_type = #tpu.core_type<tc>, window_params = [{transform_indices = @transform_0, window_bounds = array<i64: 1, 3, 16, 16>}, {transform_indices = @transform_1, window_bounds = array<i64: 1, 3, 16, 16>}, {transform_indices = @transform_2, window_bounds = array<i64: 1, 8, 128>}]} {
    %c0_i32 = arith.constant 0 : i32
    %0 = arith.cmpi eq, %arg1, %c0_i32 : i32
    %1 = arith.extui %0 : i1 to i32
    %c0_i32_0 = arith.constant 0 : i32
    %2 = arith.cmpi ne, %1, %c0_i32_0 : i32
    scf.if %2 {
      %cst_30 = arith.constant 0.000000e+00 : f32
      %62 = vector.broadcast %cst_30 : f32 to vector<1x16xf32>
      %c0_31 = arith.constant 0 : index
      %c0_32 = arith.constant 0 : index
      %63 = vector.load %arg5[%c0_31, %c0_32] : memref<1x16xf32, #tpu.memory_space<vmem>>, vector<1x16xf32>
      tpu.vector_store %arg5[%c0_31, %c0_32], %62 {strides = array<i32>} : memref<1x16xf32, #tpu.memory_space<vmem>>, vector<1x16xf32>,
    } else {
    }
    %c16_i32 = arith.constant 16 : i32
    %3 = arith.muli %arg1, %c16_i32 : i32
    %4 = tpu.iota {dimensions = array<i32: 1>} : vector<16x16xi32>
    %c2_i32 = arith.constant 2 : i32
    %5 = vector.broadcast %c2_i32 : i32 to vector<16x16xi32>
    %6 = arith.cmpi sge, %4, %5 : vector<16x16xi32>
    %c14_i32 = arith.constant 14 : i32
    %7 = vector.broadcast %c14_i32 : i32 to vector<16x16xi32>
    %8 = arith.cmpi slt, %4, %7 : vector<16x16xi32>
    %9 = arith.andi %6, %8 : vector<16x16xi1>
    %c0_i32_1 = arith.constant 0 : i32
    %c16_i32_2 = arith.constant 16 : i32
    %10 = arith.muli %c0_i32_1, %c16_i32_2 : i32
    %11 = tpu.assume_multiple %10, 8 : i32
    %c0 = arith.constant 0 : index
    %c0_3 = arith.constant 0 : index
    %12 = arith.index_cast %11 : i32 to index
    %c0_4 = arith.constant 0 : index
    %13 = vector.load %arg2[%c0, %c0_3, %12, %c0_4] : memref<1x3x16x16xf32, #tpu.memory_space<vmem>>, vector<1x1x16x16xf32>
    %14 = vector.shape_cast %13 : vector<1x1x16x16xf32> to vector<16x16xf32>
    %c0_5 = arith.constant 0 : index
    %c0_6 = arith.constant 0 : index
    %15 = arith.index_cast %11 : i32 to index
    %c0_7 = arith.constant 0 : index
    %16 = vector.load %arg3[%c0_5, %c0_6, %15, %c0_7] : memref<1x3x16x16xf32, #tpu.memory_space<vmem>>, vector<1x1x16x16xf32>
    %17 = vector.shape_cast %16 : vector<1x1x16x16xf32> to vector<16x16xf32>
    %18 = arith.subf %14, %17 : vector<16x16xf32>
    %cst = arith.constant 0.256788224 : f32
    %19 = vector.broadcast %cst : f32 to vector<16x16xf32>
    %20 = arith.mulf %19, %18 : vector<16x16xf32>
    %c0_8 = arith.constant 0 : index
    %c1 = arith.constant 1 : index
    %21 = arith.index_cast %11 : i32 to index
    %c0_9 = arith.constant 0 : index
    %22 = vector.load %arg2[%c0_8, %c1, %21, %c0_9] : memref<1x3x16x16xf32, #tpu.memory_space<vmem>>, vector<1x1x16x16xf32>
    %23 = vector.shape_cast %22 : vector<1x1x16x16xf32> to vector<16x16xf32>
    %c0_10 = arith.constant 0 : index
    %c1_11 = arith.constant 1 : index
    %24 = arith.index_cast %11 : i32 to index
    %c0_12 = arith.constant 0 : index
    %25 = vector.load %arg3[%c0_10, %c1_11, %24, %c0_12] : memref<1x3x16x16xf32, #tpu.memory_space<vmem>>, vector<1x1x16x16xf32>
    %26 = vector.shape_cast %25 : vector<1x1x16x16xf32> to vector<16x16xf32>
    %27 = arith.subf %23, %26 : vector<16x16xf32>
    %cst_13 = arith.constant 0.50412941 : f32
    %28 = vector.broadcast %cst_13 : f32 to vector<16x16xf32>
    %29 = arith.mulf %28, %27 : vector<16x16xf32>
    %30 = arith.addf %20, %29 : vector<16x16xf32>
    %c0_14 = arith.constant 0 : index
    %c2 = arith.constant 2 : index
    %31 = arith.index_cast %11 : i32 to index
    %c0_15 = arith.constant 0 : index
    %32 = vector.load %arg2[%c0_14, %c2, %31, %c0_15] : memref<1x3x16x16xf32, #tpu.memory_space<vmem>>, vector<1x1x16x16xf32>
    %33 = vector.shape_cast %32 : vector<1x1x16x16xf32> to vector<16x16xf32>
    %c0_16 = arith.constant 0 : index
    %c2_17 = arith.constant 2 : index
    %34 = arith.index_cast %11 : i32 to index
    %c0_18 = arith.constant 0 : index
    %35 = vector.load %arg3[%c0_16, %c2_17, %34, %c0_18] : memref<1x3x16x16xf32, #tpu.memory_space<vmem>>, vector<1x1x16x16xf32>
    %36 = vector.shape_cast %35 : vector<1x1x16x16xf32> to vector<16x16xf32>
    %37 = arith.subf %33, %36 : vector<16x16xf32>
    %cst_19 = arith.constant 0.0979058817 : f32
    %38 = vector.broadcast %cst_19 : f32 to vector<16x16xf32>
    %39 = arith.mulf %38, %37 : vector<16x16xf32>
    %40 = arith.addf %30, %39 : vector<16x16xf32>
    %41 = arith.mulf %40, %40 : vector<16x16xf32>
    %42 = arith.addi %3, %11 : i32
    %43 = tpu.iota {dimensions = array<i32: 0>} : vector<16x16xi32>
    %44 = vector.broadcast %42 : i32 to vector<16x16xi32>
    %45 = arith.addi %44, %43 : vector<16x16xi32>
    %c14_i32_20 = arith.constant 14 : i32
    %46 = vector.broadcast %c14_i32_20 : i32 to vector<16x16xi32>
    %47 = arith.cmpi slt, %45, %46 : vector<16x16xi32>
    %c2_i32_21 = arith.constant 2 : i32
    %48 = vector.broadcast %c2_i32_21 : i32 to vector<16x16xi32>
    %49 = arith.cmpi sge, %45, %48 : vector<16x16xi32>
    %50 = arith.andi %47, %49 : vector<16x16xi1>
    %51 = arith.andi %50, %9 : vector<16x16xi1>
    %cst_22 = arith.constant 0.000000e+00 : f32
    %52 = vector.broadcast %cst_22 : f32 to vector<16x16xf32>
    %53 = arith.select %51, %41, %52 : vector<16x16xi1>, vector<16x16xf32>
    %c0_23 = arith.constant 0 : index
    %c0_24 = arith.constant 0 : index
    %54 = vector.load %arg5[%c0_23, %c0_24] : memref<1x16xf32, #tpu.memory_space<vmem>>, vector<1x16xf32>
    %cst_25 = arith.constant dense<0.000000e+00> : vector<16xf32>
    %55 = vector.multi_reduction <add>, %53, %cst_25 [0] : vector<16x16xf32> to vector<16xf32>
    %56 = vector.shape_cast %55 : vector<16xf32> to vector<1x16xf32>
    %57 = arith.addf %54, %56 : vector<1x16xf32>
    %c0_26 = arith.constant 0 : index
    %c0_27 = arith.constant 0 : index
    %58 = vector.load %arg5[%c0_26, %c0_27] : memref<1x16xf32, #tpu.memory_space<vmem>>, vector<1x16xf32>
    tpu.vector_store %arg5[%c0_26, %c0_27], %57 {strides = array<i32>} : memref<1x16xf32, #tpu.memory_space<vmem>>, vector<1x16xf32>,
    %c1_i32 = arith.constant 1 : i32
    %c0_i32_28 = arith.constant 0 : i32
    %59 = arith.cmpi eq, %arg1, %c0_i32_28 : i32
    %60 = arith.extui %59 : i1 to i32
    %c0_i32_29 = arith.constant 0 : i32
    %61 = arith.cmpi ne, %60, %c0_i32_29 : i32
    scf.if %61 {
      %c0_30 = arith.constant 0 : index
      %c0_31 = arith.constant 0 : index
      %62 = vector.load %arg5[%c0_30, %c0_31] : memref<1x16xf32, #tpu.memory_space<vmem>>, vector<1x16xf32>
      %63 = vector.shape_cast %62 : vector<1x16xf32> to vector<1x1x16xf32>
      %cst_32 = arith.constant dense<0.000000e+00> : vector<1xf32>
      %64 = vector.multi_reduction <add>, %63, %cst_32 [1, 2] : vector<1x1x16xf32> to vector<1xf32>
      %65 = vector.shape_cast %64 : vector<1xf32> to vector<1x1x1xf32>
      %66 = vector.extract %65[0, 0, 0] : f32 from vector<1x1x1xf32>
      %cst_33 = arith.constant 1.000000e+00 : f32
      %cst_34 = arith.constant 1.000000e+00 : f32
      %67 = arith.mulf %cst_33, %cst_34 : f32
      %68 = arith.mulf %67, %66 : f32
      %cst_35 = arith.constant 1.440000e+02 : f32
      %69 = arith.divf %68, %cst_35 : f32
      %cst_36 = arith.constant 9.99999993E-9 : f32
      %70 = arith.addf %69, %cst_36 : f32
      %71 = arith.divf %67, %70 : f32
      %72 = math.log %71 : f32
      %cst_37 = arith.constant 0.434294492 : f32
      %73 = arith.mulf %72, %cst_37 : f32
      %cst_38 = arith.constant 1.000000e+01 : f32
      %74 = arith.mulf %cst_38, %73 : f32
      %75 = vector.broadcast %74 : f32 to vector<1x8x128xf32>
      %c0_39 = arith.constant 0 : index
      %c0_40 = arith.constant 0 : index
      %c0_41 = arith.constant 0 : index
      %76 = vector.load %arg4[%c0_39, %c0_40, %c0_41] : memref<1x8x128xf32, #tpu.memory_space<vmem>>, vector<1x8x128xf32>
      tpu.vector_store %arg4[%c0_39, %c0_40, %c0_41], %75 {strides = array<i32>} : memref<1x8x128xf32, #tpu.memory_space<vmem>>, vector<1x8x128xf32>,
    } else {
    }
    return
  }
  func.func @transform_0(%arg0: i32, %arg1: i32) -> (i32, i32, i32, i32) {
    %c0_i32 = arith.constant 0 : i32
    %c0_i32_0 = arith.constant 0 : i32
    %c0_i32_1 = arith.constant 0 : i32
    return %arg0, %c0_i32, %arg1, %c0_i32_0 : i32, i32, i32, i32
  }
  func.func @transform_1(%arg0: i32, %arg1: i32) -> (i32, i32, i32, i32) {
    %c0_i32 = arith.constant 0 : i32
    %c0_i32_0 = arith.constant 0 : i32
    %c0_i32_1 = arith.constant 0 : i32
    return %arg0, %c0_i32, %arg1, %c0_i32_0 : i32, i32, i32, i32
  }
  func.func @transform_2(%arg0: i32, %arg1: i32) -> (i32, i32, i32) {
    %c0_i32 = arith.constant 0 : i32
    %c0_i32_0 = arith.constant 0 : i32
    %c0_i32_1 = arith.constant 0 : i32
    return %arg0, %c0_i32, %c0_i32_0 : i32, i32, i32
  }
}

</mosaic_0001>

<llo_original>
// kernel: tpu_custom_call.1
$region0: #{tpu_custom_call.1}
  #allocation0 [shape = 'u32[]', space=smem, size = 0x4, offset = 0x4, fixed_abs, tag = 'smem constant byte address 0x4 - core index']
  #allocation1 [shape = 'u32[72,128]{1,0:T(1,128)}', space=vmem, size = 0x9000, scoped, tag = 'internal scratch']
  #allocation2 [shape = 'f32[1,16]{1,0:T(1,128)}', space=vmem, size = 0x200, scoped, tag = 'scratch operand']
  %s0 = inlined_call_operand.hbm [shape: f32[2,3,16,16], index: 0, kind: input, shape index: {}]
  %s1 = inlined_call_operand.hbm [shape: f32[2,3,16,16], index: 1, kind: input, shape index: {}]
  %s2 = inlined_call_operand.hbm [shape: f32[2,8,128], index: 2, kind: output, shape index: {}]
  %s3 = sld [smem:[#allocation0]]
  $region57: #{tpu_custom_call.1} parent=0
    _
  %s5 = ssub.s32 1, %s3
  %s6 = scalar_select 0, %s5, %s3
  $region1: #{tpu_custom_call.1} parent=0
    #allocation3 [shape = 'u8[49152]{0}', space=vmem, size = 0xc000, scoped, tag = 'input window, operand 0']
    #allocation4 [shape = 's32[2]{0}', space=sflag, size = 0x8, scoped, tag = 'scoped memory for tpu_custom_call.1']
    #allocation5 [shape = 's32[2]{0}', space=sflag, size = 0x8, scoped, tag = 'scoped memory for tpu_custom_call.1']
    #allocation6 [shape = 'u8[49152]{0}', space=vmem, size = 0xc000, scoped, tag = 'input window, operand 1']
    #allocation7 [shape = 's32[2]{0}', space=sflag, size = 0x8, scoped, tag = 'scoped memory for tpu_custom_call.1']
    #allocation8 [shape = 'u8[8192]{0}', space=vmem, size = 0x2000, scoped, tag = 'output window, operand 0']
    %7 = vsyncpa [#allocation4], 0
    %s8 = scalar_lea.sflag [#allocation4], 1
    %9 = vsyncpa %s8, 0
    %10 = vsyncpa [#allocation7], 0
    %s11 = scalar_lea.sflag [#allocation7], 1
    %12 = vsyncpa %s11, 0
    %13 = vsyncpa [#allocation5], 0
    %s14 = scalar_lea.sflag [#allocation5], 1
    %15 = vsyncpa %s14, 0
    loop: start=0, step=1, limit=4
    $region2: #{tpu_custom_call.1} parent=1 // loop_pre_header
      _
    $region3: #{tpu_custom_call.1} parent=1 // loop_header
      %s17 = sphi 0, %s21
      %p18 = scmp.ge.s32.totalorder %s17, 4
      %s24 = sphi 0, %s36
      %s25 = sphi 0, %s32
      %s26 = sphi 0, %s24
      %s27 = sphi 0, %s25
      %s28 = sphi 0, %s26
      %s29 = sphi 0, %s27
      %s41 = sphi 0, %s43
      %s44 = sphi 0, %s41
      %s45 = sphi 0, %s44
      %s61 = sphi 0, %s45
      %s69 = sphi 0, %s71
      %s72 = sphi 0, %s69
      %s73 = sphi 0, %s72
      %s89 = sphi 0, %s73
      %s95 = sphi 0, %s97
      %s98 = sphi 0, %s95
      %s99 = sphi 0, %s98
      %s115 = sphi 0, %s99
    $region4: #{tpu_custom_call.1} parent=1 // loop_header_branch
      %20 = sbr.rel (%p18) target = $region8
    $region5: #{tpu_custom_call.1} parent=1 // loop_body
      %s22 = ssub.s32 %s17, 1
      %s23 = ssub.s32 %s17, 2
      %s30 = sadd.s32 1, %s25
      %p31 = scmp.ge.s32.totalorder %s30, 1
      %s32 = scalar_select %p31, 0, %s30
      %s33 = sadd.s32 1, %s24
      %s34 = scalar_select %p31, %s33, %s24
      %p35 = scmp.ge.s32.totalorder %s34, 2
      %s36 = scalar_select %p35, 0, %s34
      %s37 = ssub.s32 %s24, %s36
      %s38 = ssub.s32 %s25, %s32
      %s39 = sor.u32 %s37, %s38
      %p40 = scmp.eq.s32.totalorder %s39, 0
      %s42 = sadd.s32 %s41, 1
      %s43 = scalar_select %p40, %s41, %s42
      %p46 = pneg %p40
      %p47 = scmp.eq.s32.totalorder %s17, 1
      %p48 = por %p46, %p47
      %p49 = scmp.ne.s32.totalorder %s41, %s44
      %p50 = scmp.eq.s32.totalorder %s17, 0
      %p51 = por %p49, %p50
      %p52 = scmp.ne.s32.totalorder %s41, %s44
      %p53 = scmp.eq.s32.totalorder %s22, 1
      %p54 = por %p52, %p53
      %p55 = scmp.ne.s32.totalorder %s44, %s45
      %p56 = scmp.eq.s32.totalorder %s22, 0
      %p57 = por %p55, %p56
      %p58 = scmp.ne.s32.totalorder %s44, %s45
      %p59 = scmp.eq.s32.totalorder %s23, 1
      %p60 = por %p58, %p59
      %p62 = scmp.ne.s32.totalorder %s45, %s61
      %p63 = scmp.eq.s32.totalorder %s23, 0
      %p64 = por %p62, %p63
      %s65 = ssub.s32 %s24, %s36
      %s66 = ssub.s32 %s25, %s32
      %s67 = sor.u32 %s65, %s66
      %p68 = scmp.eq.s32.totalorder %s67, 0
      %s70 = sadd.s32 %s69, 1
      %s71 = scalar_select %p68, %s69, %s70
      %p74 = pneg %p68
      %p75 = scmp.eq.s32.totalorder %s17, 1
      %p76 = por %p74, %p75
      %p77 = scmp.ne.s32.totalorder %s69, %s72
      %p78 = scmp.eq.s32.totalorder %s17, 0
      %p79 = por %p77, %p78
      %p80 = scmp.ne.s32.totalorder %s69, %s72
      %p81 = scmp.eq.s32.totalorder %s22, 1
      %p82 = por %p80, %p81
      %p83 = scmp.ne.s32.totalorder %s72, %s73
      %p84 = scmp.eq.s32.totalorder %s22, 0
      %p85 = por %p83, %p84
      %p86 = scmp.ne.s32.totalorder %s72, %s73
      %p87 = scmp.eq.s32.totalorder %s23, 1
      %p88 = por %p86, %p87
      %p90 = scmp.ne.s32.totalorder %s73, %s89
      %p91 = scmp.eq.s32.totalorder %s23, 0
      %p92 = por %p90, %p91
      %s93 = ssub.s32 %s24, %s36
      %p94 = scmp.eq.s32.totalorder %s93, 0
      %s96 = sadd.s32 %s95, 1
      %s97 = scalar_select %p94, %s95, %s96
      %p100 = pneg %p94
      %p101 = scmp.eq.s32.totalorder %s17, 1
      %p102 = por %p100, %p101
      %p103 = scmp.ne.s32.totalorder %s95, %s98
      %p104 = scmp.eq.s32.totalorder %s17, 0
      %p105 = por %p103, %p104
      %p106 = scmp.ne.s32.totalorder %s95, %s98
      %p107 = scmp.eq.s32.totalorder %s22, 1
      %p108 = por %p106, %p107
      %p109 = scmp.ne.s32.totalorder %s98, %s99
      %p110 = scmp.eq.s32.totalorder %s22, 0
      %p111 = por %p109, %p110
      %p112 = scmp.ne.s32.totalorder %s98, %s99
      %p113 = scmp.eq.s32.totalorder %s23, 1
      %p114 = por %p112, %p113
      %p116 = scmp.ne.s32.totalorder %s99, %s115
      %p117 = scmp.eq.s32.totalorder %s23, 0
      %p118 = por %p116, %p117
      %p119 = scmp.le.s32.totalorder 1, %s17
      %p120 = scmp.lt.s32.totalorder %s17, 3
      %p121 = pnand %p119, %p120
      %p122 = pneg %p121
      // Predicated region
      $region9: #{tpu_custom_call.1} parent=5 // pred_check
        _
      $region10: #{tpu_custom_call.1} parent=5 // pred_check_branch
        %124 = sbr.rel (%p121) target = $region12
      $region11: #{tpu_custom_call.1} parent=5 // pred_region
        %s125 = ssub.s32 %s17, 1
      $region12: #{tpu_custom_call.1} parent=5 // pred_fallthru
        _
      %p126 = scmp.lt.s32.totalorder %s17, 2
      // Predicated region
      $region13: #{tpu_custom_call.1} parent=5 // pred_check
        %p127 = pneg %p126
      $region14: #{tpu_custom_call.1} parent=5 // pred_check_branch
        %129 = sbr.rel (%p127) target = $region16
      $region15: #{tpu_custom_call.1} parent=5 // pred_region
        // Predicated region
        $region17: #{tpu_custom_call.1} parent=15 // pred_check
          %p130 = pneg %p51
        $region18: #{tpu_custom_call.1} parent=15 // pred_check_branch
          %132 = sbr.rel (%p130) target = $region20
        $region19: #{tpu_custom_call.1} parent=15 // pred_region
          %s133 = sand.u32 %s41, 1
          %s134 = scalar_lea.sflag [#allocation4], %s133
          %s135 = sand.u32 %s41, 1
          %s136 = smul.addr %s135, 48
          %s137 = scalar_lea.vmem [#allocation3], %s136
          %s138 = smul.u32 2, %s25
          %140 = vsyncadd %s134, 0
          %s141 = smul.addr %s24, 6
          %s142 = sadd.s32 %s138, %s141
          %s143 = smul.addr %s142, 8
          %s144 = scalar_lea.hbm %s0, %s143
          %s145 = sshll.u32 %s144, 4
          %s146 = int_to_ptr.hbm [resolvable:$true] %s145
          %s147 = sshll.u32 %s137, 4
          %s148 = int_to_ptr.vmem [resolvable:$true] %s147
          %153 = dma.hbm_to_vmem [thread:$0]  %s146, 768, %s148, %s134, 128, 128, 8
        $region20: #{tpu_custom_call.1} parent=15 // pred_fallthru
          _
        // Predicated region
        $region21: #{tpu_custom_call.1} parent=15 // pred_check
          %p154 = pneg %p79
        $region22: #{tpu_custom_call.1} parent=15 // pred_check_branch
          %156 = sbr.rel (%p154) target = $region24
        $region23: #{tpu_custom_call.1} parent=15 // pred_region
          %s157 = sand.u32 %s69, 1
          %s158 = scalar_lea.sflag [#allocation7], %s157
          %s159 = sand.u32 %s69, 1
          %s160 = smul.addr %s159, 48
          %s161 = scalar_lea.vmem [#allocation6], %s160
          %s162 = smul.u32 2, %s25
          %164 = vsyncadd %s158, 0
          %s165 = smul.addr %s24, 6
          %s166 = sadd.s32 %s162, %s165
          %s167 = smul.addr %s166, 8
          %s168 = scalar_lea.hbm %s1, %s167
          %s169 = sshll.u32 %s168, 4
          %s170 = int_to_ptr.hbm [resolvable:$true] %s169
          %s171 = sshll.u32 %s161, 4
          %s172 = int_to_ptr.vmem [resolvable:$true] %s171
          %177 = dma.hbm_to_vmem [thread:$0]  %s170, 768, %s172, %s158, 128, 128, 8
        $region24: #{tpu_custom_call.1} parent=15 // pred_fallthru
          _
      $region16: #{tpu_custom_call.1} parent=5 // pred_fallthru
        _
      %p178 = scmp.le.s32.totalorder 1, %s17
      %p179 = scmp.lt.s32.totalorder %s17, 3
      %p180 = pnand %p178, %p179
      %p181 = pneg %p180
      // Predicated region
      $region25: #{tpu_custom_call.1} parent=5 // pred_check
        _
      $region26: #{tpu_custom_call.1} parent=5 // pred_check_branch
        %183 = sbr.rel (%p180) target = $region28
      $region27: #{tpu_custom_call.1} parent=5 // pred_region
        %s184 = ssub.s32 %s17, 1
        %s185 = sand.u32 %s44, 1
        %s186 = scalar_lea.sflag [#allocation4], %s185
        %s187 = sand.u32 %s44, 1
        %s188 = smul.addr %s187, 48
        %s189 = scalar_lea.vmem [#allocation3], %s188
        // Predicated region
        $region29: #{tpu_custom_call.1} parent=27 // pred_check
          %p190 = pneg %p57
        $region30: #{tpu_custom_call.1} parent=27 // pred_check_branch
          %192 = sbr.rel (%p190) target = $region32
        $region31: #{tpu_custom_call.1} parent=27 // pred_region
          %194 = dma.done %s186, 768
        $region32: #{tpu_custom_call.1} parent=27 // pred_fallthru
          _
        %s195 = sand.u32 %s72, 1
        %s196 = scalar_lea.sflag [#allocation7], %s195
        %s197 = sand.u32 %s72, 1
        %s198 = smul.addr %s197, 48
        %s199 = scalar_lea.vmem [#allocation6], %s198
        // Predicated region
        $region33: #{tpu_custom_call.1} parent=27 // pred_check
          %p200 = pneg %p85
        $region34: #{tpu_custom_call.1} parent=27 // pred_check_branch
          %202 = sbr.rel (%p200) target = $region36
        $region35: #{tpu_custom_call.1} parent=27 // pred_region
          %204 = dma.done %s196, 768
        $region36: #{tpu_custom_call.1} parent=27 // pred_fallthru
          _
        %s205 = sand.u32 %s44, 1
        %s206 = scalar_lea.sflag [#allocation4], %s205
        %s207 = sand.u32 %s44, 1
        %s208 = smul.addr %s207, 48
        %s209 = scalar_lea.vmem [#allocation3], %s208
        %p210 = pneg %p57
        %p211 = pneg %p54
        %s212 = sand.u32 %s72, 1
        %s213 = scalar_lea.sflag [#allocation7], %s212
        %s214 = sand.u32 %s72, 1
        %s215 = smul.addr %s214, 48
        %s216 = scalar_lea.vmem [#allocation6], %s215
        %p217 = pneg %p85
        %p218 = pneg %p82
        %p219 = pneg %p111
        %p220 = pneg %p108
        %s221 = sand.u32 %s98, 1
        %s222 = scalar_lea.sflag [#allocation5], %s221
        %s223 = sand.u32 %s98, 1
        %s224 = smul.addr %s223, 8
        %s225 = scalar_lea.vmem [#allocation8], %s224
        %s226 = smul.u32 2, %s27
        %s227 = smul.u32 2, %s27
        %p228 = scmp.eq.s32.totalorder %s27, 0
        // Predicated region
        $region37: #{tpu_custom_call.1} parent=27 // pred_check
          %p229 = pneg %p228
        $region38: #{tpu_custom_call.1} parent=27 // pred_check_branch
          %231 = sbr.rel (%p229) target = $region40
        $region39: #{tpu_custom_call.1} parent=27 // pred_region
          %vm232 = vcmask 122880
          %233 = vst.msk [vmem:[#allocation2] sm:$0x1] %vm232, 0.0
        $region40: #{tpu_custom_call.1} parent=27 // pred_fallthru
          _
        %s234 = smul.u32 %s27, 16
        %v235 = vlaneseq
        %v236 = vand.u32 %v235, 127
        %vm237 = vcmp.ge.s32.totalorder %v236, 2
        %vm238 = vcmp.lt.s32.totalorder %v236, 14
        %vm239 = vmand %vm237, %vm238
        %v240 = vld [vmem:[%s189] sm:$0xff]
        %v241 = vld [vmem:[%s189 + $0x8] sm:$0xff]
        %v242 = vld [vmem:[%s199] sm:$0xff]
        %v243 = vld [vmem:[%s199 + $0x8] sm:$0xff]
        %v244 = vsub.f32 %v240, %v242
        %v245 = vsub.f32 %v241, %v243
        %v246 = vmul.f32 %v244, 0.25678822
        %v247 = vmul.f32 %v245, 0.25678822
        %s248 = sadd.s32 0, 16
        %s249 = scalar_lea.vmem %s189, %s248 [#allocation3]
        %v250 = vld [vmem:[%s249] sm:$0xff]
        %v251 = vld [vmem:[%s249 + $0x8] sm:$0xff]
        %s252 = scalar_lea.vmem %s199, %s248 [#allocation6]
        %v253 = vld [vmem:[%s252] sm:$0xff]
        %v254 = vld [vmem:[%s252 + $0x8] sm:$0xff]
        %v255 = vsub.f32 %v250, %v253
        %v256 = vsub.f32 %v251, %v254
        %v257 = vmul.f32 %v255, 0.5041294
        %v258 = vmul.f32 %v256, 0.5041294
        %v259 = vadd.f32 %v246, %v257
        %v260 = vadd.f32 %v247, %v258
        %s261 = sadd.s32 0, 32
        %s262 = scalar_lea.vmem %s189, %s261 [#allocation3]
        %v263 = vld [vmem:[%s262] sm:$0xff]
        %v264 = vld [vmem:[%s262 + $0x8] sm:$0xff]
        %s265 = scalar_lea.vmem %s199, %s261 [#allocation6]
        %v266 = vld [vmem:[%s265] sm:$0xff]
        %v267 = vld [vmem:[%s265 + $0x8] sm:$0xff]
        %v268 = vsub.f32 %v263, %v266
        %v269 = vsub.f32 %v264, %v267
        %v270 = vmul.f32 %v268, 0.09790588
        %v271 = vmul.f32 %v269, 0.09790588
        %v272 = vadd.f32 %v259, %v270
        %v273 = vadd.f32 %v260, %v271
        %v274 = vmul.f32 %v272, %v272
        %v275 = vmul.f32 %v273, %v273
        %s276 = sadd.s32 %s234, 0
        %v277 = vlaneseq
        %v278 = vshrl.u32 %v277, 7
        %v279 = vadd.s32 %v278, 8
        %v280 = vstv %s276
        %v281 = vadd.s32 %v280, %v278
        %v282 = vadd.s32 %v280, %v279
        %vm283 = vcmp.lt.s32.totalorder %v281, 14
        %vm284 = vcmp.lt.s32.totalorder %v282, 14
        %vm285 = vcmp.ge.s32.totalorder %v281, 2
        %vm286 = vcmp.ge.s32.totalorder %v282, 2
        %vm287 = vmand %vm283, %vm285
        %vm288 = vmand %vm284, %vm286
        %vm289 = vmand %vm287, %vm239
        %vm290 = vmand %vm288, %vm239
        %v291 = vsel %vm289, %v274, 0.0
        %v292 = vsel %vm290, %v275, 0.0
        %v293 = vld [vmem:[#allocation2] sm:$0x1]
        %vm294 = vcmask 130048
        %v295 = vsel %vm294, %v291, 0.0
        %v296 = vsel %vm294, %v292, 0.0
        %v297 = vadd.f32 %v295, %v296
        %v298 = vrot.slane %v297, 4
        %v299 = vadd.f32 %v297, %v298
        %v300 = vrot.slane %v299, 2
        %v301 = vadd.f32 %v299, %v300
        %v302 = vrot.slane %v301, 1
        %v303 = vadd.f32 %v301, %v302
        %v304 = vadd.f32 %v293, %v303
        %vm305 = vcmask 122880
        %306 = vst.msk [vmem:[#allocation2] sm:$0x1] %vm305, %v304
        // Predicated region
        $region41: #{tpu_custom_call.1} parent=27 // pred_check
          %p307 = pneg %p228
        $region42: #{tpu_custom_call.1} parent=27 // pred_check_branch
          %309 = sbr.rel (%p307) target = $region44
        $region43: #{tpu_custom_call.1} parent=27 // pred_region
          %v310 = vld [vmem:[#allocation2] sm:$0x1]
          %v311 = vsel %vm305, %v310, 0.0
          %312 = vadd.xlane.f32.xlu0 %v311
          %v313 = vpop.xlane.xlu0 %312
          %v314 = vrot.slane %v313, 4
          %v315 = vadd.f32 %v313, %v314
          %v316 = vrot.slane %v315, 2
          %v317 = vadd.f32 %v315, %v316
          %v318 = vrot.slane %v317, 1
          %v319 = vadd.f32 %v317, %v318
          %s320 = vtos %v319
          %v321 = vrcp.pop 144.0
          %v322 = vmul.f32 144.0, %v321
          %v323 = vsub.f32 1.0, %v322
          %v324 = vmul.f32 %v321, %v323
          %v325 = vadd.f32 %v321, %v324
          %vm326 = vweird.f32 %v321
          %v327 = vsel %vm326, %v321, %v325
          %s328 = vtos %v327
          %s329 = smul.f32 %s320, %s328
          %s330 = sadd.f32 %s329, 1e-08
          %v331 = vstv %s330
          %v332 = vrcp.pop %v331
          %v333 = vmul.f32 %v331, %v332
          %v334 = vsub.f32 1.0, %v333
          %v335 = vmul.f32 %v332, %v334
          %v336 = vadd.f32 %v332, %v335
          %vm337 = vweird.f32 %v331
          %vm338 = vweird.f32 %v332
          %vm339 = vmor %vm337, %vm338
          %v340 = vsel %vm339, %v332, %v336
          %v341 = vand.u32 2147483647, %v331
          %vm342 = vcmp.eq.f32.partialorder %v341, 8.507059e+37
          %v343 = vand.u32 %v331, 2147483648
          %v344 = vor.u32 1.1754944e-38, %v343
          %v345 = vsel %vm342, %v344, %v340
          %s346 = vtos %v345
          %v347 = vstv %s346
          %v348 = vlog2.pop %v347
          %v349 = vmul.f32 %v348, 0.6931472
          %s350 = vtos %v349
          %s351 = smul.f32 %s350, 0.4342945
          %s352 = smul.f32 %s351, 10.0
          %v353 = vstv %s352
          %354 = vst [vmem:[%s225] sm:$0xff] %v353
        $region44: #{tpu_custom_call.1} parent=27 // pred_fallthru
          _
        %s355 = sand.u32 %s98, 1
        %s356 = scalar_lea.sflag [#allocation5], %s355
        %s357 = sand.u32 %s98, 1
        %s358 = smul.addr %s357, 8
        %s359 = scalar_lea.vmem [#allocation8], %s358
        // Predicated region
        $region45: #{tpu_custom_call.1} parent=27 // pred_check
          %p360 = pneg %p108
        $region46: #{tpu_custom_call.1} parent=27 // pred_check_branch
          %362 = sbr.rel (%p360) target = $region48
        $region47: #{tpu_custom_call.1} parent=27 // pred_region
          %364 = vsyncadd %s356, 0
          %s365 = smul.addr %s26, 8
          %s366 = scalar_lea.hbm %s2, %s365
          %s368 = sshll.u32 %s359, 4
          %s369 = int_to_ptr.vmem [resolvable:$true] %s368
          %s370 = sshll.u32 %s366, 4
          %s371 = int_to_ptr.hbm [resolvable:$true] %s370
          %373 = dma.vmem_to_hbm [thread:$0]  %s369, 128, %s371, %s356
        $region48: #{tpu_custom_call.1} parent=27 // pred_fallthru
          _
      $region28: #{tpu_custom_call.1} parent=5 // pred_fallthru
        _
      %p374 = scmp.le.s32.totalorder 2, %s17
      // Predicated region
      $region49: #{tpu_custom_call.1} parent=5 // pred_check
        %p375 = pneg %p374
      $region50: #{tpu_custom_call.1} parent=5 // pred_check_branch
        %377 = sbr.rel (%p375) target = $region52
      $region51: #{tpu_custom_call.1} parent=5 // pred_region
        %s378 = ssub.s32 %s17, 2
        // Predicated region
        $region53: #{tpu_custom_call.1} parent=51 // pred_check
          %p379 = pneg %p114
        $region54: #{tpu_custom_call.1} parent=51 // pred_check_branch
          %381 = sbr.rel (%p379) target = $region56
        $region55: #{tpu_custom_call.1} parent=51 // pred_region
          %s382 = sand.u32 %s99, 1
          %s383 = scalar_lea.sflag [#allocation5], %s382
          %s384 = sand.u32 %s99, 1
          %s385 = smul.addr %s384, 8
          %s386 = scalar_lea.vmem [#allocation8], %s385
          %388 = dma.done %s383, 128
        $region56: #{tpu_custom_call.1} parent=51 // pred_fallthru
          _
      $region52: #{tpu_custom_call.1} parent=5 // pred_fallthru
        _
    $region6: #{tpu_custom_call.1} parent=1 // loop_footer
      %s21 = sadd.s32 1, %s17
    $region7: #{tpu_custom_call.1} parent=1 // loop_footer_branch
      %16 = sbr.rel target = $region3
    $region8: #{tpu_custom_call.1} parent=1 // loop_exit
      _
    %389 = vsyncpa [#allocation4], 1
    %s390 = scalar_lea.sflag [#allocation4], 1
    %391 = vsyncpa %s390, 1
    %392 = vsyncpa [#allocation7], 1
    %s393 = scalar_lea.sflag [#allocation7], 1
    %394 = vsyncpa %s393, 1
    %395 = vsyncpa [#allocation5], 1
    %s396 = scalar_lea.sflag [#allocation5], 1
    %397 = vsyncpa %s396, 1

</llo_original>
